<compile_context>
chip_gen: v7x
topology: tpu7x:2x2x1
jax: 0.10.0
libtpu: 0.0.40
codegen_flags: <defaults>
</compile_context>

<pallas_src>
import functools
import math

import jax
import jax.numpy as jnp
from jax.experimental import pallas as pl
from jax.experimental.pallas import tpu as pltpu


# --------------------------------------------------------------------------
# helpers
# --------------------------------------------------------------------------
_MASK_VALUE = -1e30  # finite "minus infinity" (avoids inf-inf NaNs for fully
                     # masked rows if this kernel is reused with padding masks)


def _default_vmem_limit():
    """Scoped-VMEM budget with headroom: ~75% of physical (48 MiB on v7x,
    96 MiB on v5e/v6e). Falls back to 32 MiB if the query is unavailable."""
    try:
        cap = pltpu.get_tpu_info().vmem_capacity_bytes
        return int(0.75 * cap)
    except Exception:  # pragma: no cover - conservative fallback
        return 32 * 1024 * 1024


_VMEM_LIMIT = _default_vmem_limit()


def _pick_tile(dim, pref, align):
    """Largest legal tile <= pref that is a multiple of `align` and divides
    `dim`; falls back to the full dim (a full-extent block is always legal)."""
    if dim <= pref:
        return dim
    t = (pref // align) * align
    while t >= align:
        if dim % t == 0:
            return t
        t -= align
    return dim


def _half_swap(t, hs):
    """cat(t[:, hs/2:], t[:, :hs/2]) -- the rotate_half permutation WITHOUT the
    sign (the sign is folded into the sin tables by the wrapper)."""
    half = hs // 2
    if hs % 128 == 0:
        # Lane-aligned halves: XLU rotate, overlaps with MXU work for free.
        return pltpu.roll(t, shift=half, axis=-1)
    # Small-head fallback (e.g. the toy config below, hs < 128).
    return jnp.concatenate([t[:, half:], t[:, :half]], axis=-1)


# --------------------------------------------------------------------------
# Kernel 1: tiled linear layer  o = x @ w + b
# --------------------------------------------------------------------------
def _linear_kernel(x_ref, w_ref, b_ref, o_ref, acc_ref):
    k = pl.program_id(2)

    @pl.when(k == 0)
    def _init():
        acc_ref[...] = jnp.zeros_like(acc_ref)

    # bf16 MXU operands, f32 accumulation.
    acc_ref[...] += jnp.dot(
        x_ref[...].astype(jnp.bfloat16),
        w_ref[...].astype(jnp.bfloat16),
        preferred_element_type=jnp.float32,
    )

    @pl.when(k == pl.num_programs(2) - 1)
    def _epilogue():
        o_ref[...] = (acc_ref[...] + b_ref[...]).astype(o_ref.dtype)


def pallas_linear(x, w, b, *, tm=256, tn=256, tk=512):
    # x: (M, K), w: (K, N), b: (N,)
    M, K = x.shape
    N = w.shape[1]
    tm = _pick_tile(M, tm, 8)
    tn = _pick_tile(N, tn, 128)
    tk = _pick_tile(K, tk, 128)
    grid = (M // tm, N // tn, K // tk)
    return pl.pallas_call(
        _linear_kernel,
        out_shape=jax.ShapeDtypeStruct((M, N), x.dtype),
        grid_spec=pltpu.PrefetchScalarGridSpec(
            num_scalar_prefetch=0,
            grid=grid,
            in_specs=[
                pl.BlockSpec((tm, tk), lambda i, j, k: (i, k)),
                pl.BlockSpec((tk, tn), lambda i, j, k: (k, j)),
                pl.BlockSpec((1, tn), lambda i, j, k: (0, j)),
            ],
            out_specs=pl.BlockSpec((tm, tn), lambda i, j, k: (i, j)),
            scratch_shapes=[pltpu.VMEM((tm, tn), jnp.float32)],
        ),
        compiler_params=pltpu.CompilerParams(
            dimension_semantics=("parallel", "parallel", "arbitrary"),
            vmem_limit_bytes=_VMEM_LIMIT,
        ),
    )(x, w, b.reshape(1, N))


# --------------------------------------------------------------------------
# Kernel 2: flash-style attention (RoPE + causal mask + online softmax)
#   grid = (B, n_heads, q-tiles, kv-tiles); KV axis innermost & "arbitrary".
# --------------------------------------------------------------------------
def _flash_attn_kernel(q_ref, k_ref, v_ref, cq_ref, sq_ref, ck_ref, sk_ref,
                       o_ref, m_ref, l_ref, acc_ref, qrope_ref, *, tq, tkv, hs):
    qi = pl.program_id(2)
    ki = pl.program_id(3)

    @pl.when(ki == 0)
    def _init():
        m_ref[...] = jnp.full_like(m_ref, -jnp.inf)
        l_ref[...] = jnp.zeros_like(l_ref)
        acc_ref[...] = jnp.zeros_like(acc_ref)
        # RoPE + 1/sqrt(hs) scaling of q, hoisted out of the KV loop (the scale
        # and the rotate_half sign are folded into the cq/sq tables).
        q = q_ref[0, 0]
        qrope_ref[...] = q * cq_ref[...] + _half_swap(q, hs) * sq_ref[...]

    # Skip KV tiles that lie entirely above the causal diagonal.
    @pl.when(ki * tkv <= qi * tq + (tq - 1))
    def _compute():
        k = k_ref[0, 0]
        v = v_ref[0, 0]
        k = k * ck_ref[...] + _half_swap(k, hs) * sk_ref[...]

        s = jnp.dot(
            qrope_ref[...].astype(jnp.bfloat16),
            k.astype(jnp.bfloat16).T,
            preferred_element_type=jnp.float32,
        )  # (tq, tkv), f32

        row = qi * tq + jax.lax.broadcasted_iota(jnp.int32, (tq, tkv), 0)
        col = ki * tkv + jax.lax.broadcasted_iota(jnp.int32, (tq, tkv), 1)
        s = jnp.where(col <= row, s, _MASK_VALUE)

        m_prev = m_ref[...]                                      # (tq, 1)
        m_new = jnp.maximum(m_prev, jnp.max(s, axis=-1, keepdims=True))
        alpha = jnp.exp(m_prev - m_new)
        p = jnp.exp(s - m_new)                                   # f32 softmax math
        l_ref[...] = alpha * l_ref[...] + jnp.sum(p, axis=-1, keepdims=True)
        acc_ref[...] = alpha * acc_ref[...] + jnp.dot(
            p.astype(jnp.bfloat16), v.astype(jnp.bfloat16),
            preferred_element_type=jnp.float32,
        )
        m_ref[...] = m_new

    @pl.when(ki == pl.num_programs(3) - 1)
    def _finalize():
        o_ref[0, 0] = (
            acc_ref[...] * pl.reciprocal(l_ref[...], approx=True)
        ).astype(o_ref.dtype)


def pallas_flash_attention(q, k, v, cos_q, sin_q, cos_k, sin_k, *, tq=256, tkv=256):
    # q, k, v: (B, nh, T, hs);  rope tables: (T, hs)
    B, nh, T, hs = q.shape
    tq = _pick_tile(T, tq, 8)
    tkv = _pick_tile(T, tkv, 8)
    nq, nkv = T // tq, T // tkv

    kern = functools.partial(_flash_attn_kernel, tq=tq, tkv=tkv, hs=hs)
    q_spec = pl.BlockSpec((1, 1, tq, hs), lambda b, h, qi, ki: (b, h, qi, 0))
    kv_spec = pl.BlockSpec((1, 1, tkv, hs), lambda b, h, qi, ki: (b, h, ki, 0))
    rq_spec = pl.BlockSpec((tq, hs), lambda b, h, qi, ki: (qi, 0))
    rk_spec = pl.BlockSpec((tkv, hs), lambda b, h, qi, ki: (ki, 0))

    return pl.pallas_call(
        kern,
        out_shape=jax.ShapeDtypeStruct((B, nh, T, hs), q.dtype),
        grid_spec=pltpu.PrefetchScalarGridSpec(
            num_scalar_prefetch=0,
            grid=(B, nh, nq, nkv),
            in_specs=[q_spec, kv_spec, kv_spec, rq_spec, rq_spec, rk_spec, rk_spec],
            out_specs=q_spec,
            scratch_shapes=[
                pltpu.VMEM((tq, 1), jnp.float32),    # running max m
                pltpu.VMEM((tq, 1), jnp.float32),    # running sum l
                pltpu.VMEM((tq, hs), jnp.float32),   # output accumulator
                pltpu.VMEM((tq, hs), jnp.float32),   # cached RoPE'd + scaled q
            ],
        ),
        compiler_params=pltpu.CompilerParams(
            dimension_semantics=("parallel", "parallel", "parallel", "arbitrary"),
            vmem_limit_bytes=_VMEM_LIMIT,
        ),
    )(q, k, v, cos_q, sin_q, cos_k, sin_k)


# --------------------------------------------------------------------------
# Full SelfAttention forward (glue in plain JAX, compute in Pallas)
# --------------------------------------------------------------------------
def self_attention_forward(x, params, n_heads):
    B, T, C = x.shape
    hs = C // n_heads

    # 1) fused QKV projection (tiled Pallas matmul)
    qkv = pallas_linear(x.reshape(B * T, C), params["w_attn"], params["b_attn"])

    # 2) head split: single reshape + transpose to (3, B, nh, T, hs).
    # TODO(synk): for production head_size >= 128 this transpose can be removed
    # by slicing heads directly in the attention BlockSpec index_map (lane-
    # aligned head columns); with the toy head_size (8) such blocks would
    # violate the (8,128) lane-block constraint, so the transpose is kept here.
    qkv = qkv.reshape(B, T, 3, n_heads, hs).transpose(2, 0, 3, 1, 4)
    q, k, v = qkv[0], qkv[1], qkv[2]

    # 3) RoPE tables (the module's pos_emb buffer). The rotate_half sign is
    #    folded into sin_s and the 1/sqrt(hs) softmax scale into the q-side
    #    tables, so the kernel's inner loop does no extra elementwise work.
    inv_freq = 1.0 / (10000.0 ** (jnp.arange(0, hs, 2, dtype=jnp.float32) / hs))
    freqs = jnp.outer(jnp.arange(T, dtype=jnp.float32), inv_freq)   # (T, hs//2)
    cos = jnp.cos(jnp.concatenate([freqs, freqs], axis=-1))          # (T, hs)
    sin_f = jnp.sin(freqs)
    sin_s = jnp.concatenate([-sin_f, sin_f], axis=-1)                # sign folded
    scale = 1.0 / math.sqrt(hs)
    cos_q, sin_q = cos * scale, sin_s * scale
    cos_k, sin_k = cos, sin_s

    # 4) flash attention (RoPE + causal softmax attention) in Pallas
    att = pallas_flash_attention(q, k, v, cos_q, sin_q, cos_k, sin_k)

    # 5) merge heads + output projection (tiled Pallas matmul)
    y = att.transpose(0, 2, 1, 3).reshape(B * T, C)
    y = pallas_linear(y, params["w_proj"], params["b_proj"])
    # attn_dropout / resid_dropout: identity in eval mode (dropout_p = 0)
    return y.reshape(B, T, C)


# --------------------------------------------------------------------------
# Pure-JAX (f32) reference for a sanity check
# --------------------------------------------------------------------------
def reference_forward(x, params, n_heads):
    B, T, C = x.shape
    hs = C // n_heads
    qkv = x.reshape(B * T, C) @ params["w_attn"] + params["b_attn"]
    qkv = qkv.reshape(B, T, 3 * C)
    q, k, v = jnp.split(qkv, 3, axis=-1)
    to_heads = lambda t: t.reshape(B, T, n_heads, hs).transpose(0, 2, 1, 3)
    q, k, v = map(to_heads, (q, k, v))

    inv_freq = 1.0 / (10000.0 ** (jnp.arange(0, hs, 2, dtype=jnp.float32) / hs))
    seq = jnp.arange(T, dtype=jnp.float32)
    freqs = jnp.einsum("i,j->ij", seq, inv_freq)
    pos = jnp.concatenate([freqs, freqs], axis=-1)
    cos, sin = jnp.cos(pos), jnp.sin(pos)

    def rope(t):
        t1, t2 = t[..., : hs // 2], t[..., hs // 2:]
        rot = jnp.concatenate([-t2, t1], axis=-1)
        return t * cos + rot * sin

    q, k = rope(q), rope(k)
    s = jnp.einsum("bhqd,bhkd->bhqk", q, k) / math.sqrt(hs)
    mask = jnp.tril(jnp.ones((T, T), dtype=bool))
    s = jnp.where(mask, s, -jnp.inf)
    p = jax.nn.softmax(s, axis=-1)
    att = jnp.einsum("bhqk,bhkd->bhqd", p, v)
    y = att.transpose(0, 2, 1, 3).reshape(B * T, C)
    y = y @ params["w_proj"] + params["b_proj"]
    return y.reshape(B, T, C)


if __name__ == "__main__":
    # small config: d_model=32, n_heads=4 (head_size=8), seq=8, batch=2
    B, T, C, n_heads = 2, 8, 32, 4

    key = jax.random.PRNGKey(0)
    k_x, k_wa, k_ba, k_wp, k_bp = jax.random.split(key, 5)

    x = jax.random.normal(k_x, (B, T, C), dtype=jnp.float32)
    params = {
        # stored as (in, out); equivalent to PyTorch Linear weight (out, in).T
        "w_attn": 0.02 * jax.random.normal(k_wa, (C, 3 * C), dtype=jnp.float32),
        "b_attn": 0.02 * jax.random.normal(k_ba, (3 * C,), dtype=jnp.float32),
        "w_proj": 0.02 * jax.random.normal(k_wp, (C, C), dtype=jnp.float32),
        "b_proj": 0.02 * jax.random.normal(k_bp, (C,), dtype=jnp.float32),
    }

    y = self_attention_forward(x, params, n_heads)
    y = jax.block_until_ready(y)

    y_ref = reference_forward(x, params, n_heads)
    assert y.shape == (B, T, C)
    # Tolerance accounts for bf16 MXU operands + approx reciprocal (f32 accum).
    assert jnp.allclose(y, y_ref, atol=2e-2, rtol=2e-2), "mismatch vs reference"

    print("KERNEL_OK")
</pallas_src>

<mosaic_0001>
module attributes {stable_mosaic.version = 11 : i64} {
  func.func @_linear_kernel(%arg0: i32, %arg1: i32, %arg2: i32, %arg3: memref<16x32xf32, #tpu.memory_space<vmem>>, %arg4: memref<32x96xf32, #tpu.memory_space<vmem>>, %arg5: memref<1x96xf32, #tpu.memory_space<vmem>>, %arg6: memref<16x96xf32, #tpu.memory_space<vmem>>, %arg7: memref<16x96xf32, #tpu.memory_space<vmem>>) attributes {dimension_semantics = [#tpu.dimension_semantics<parallel>, #tpu.dimension_semantics<parallel>, #tpu.dimension_semantics<arbitrary>], iteration_bounds = array<i64: 1, 1, 1>, scalar_prefetch = 0 : i64, scratch_operands = 1 : i64, tpu.core_type = #tpu.core_type<tc>, window_params = [{transform_indices = @transform_0, window_bounds = array<i64: 16, 32>}, {transform_indices = @transform_1, window_bounds = array<i64: 32, 96>}, {transform_indices = @transform_2, window_bounds = array<i64: 1, 96>}, {transform_indices = @transform_3, window_bounds = array<i64: 16, 96>}]} {
    %c0_i32 = arith.constant 0 : i32
    %0 = arith.cmpi eq, %arg2, %c0_i32 : i32
    %1 = arith.extui %0 : i1 to i32
    %c0_i32_0 = arith.constant 0 : i32
    %2 = arith.cmpi ne, %1, %c0_i32_0 : i32
    scf.if %2 {
      %cst_10 = arith.constant 0.000000e+00 : f32
      %14 = vector.broadcast %cst_10 : f32 to vector<16x96xf32>
      %c0_11 = arith.constant 0 : index
      %c0_12 = arith.constant 0 : index
      %15 = vector.load %arg7[%c0_11, %c0_12] : memref<16x96xf32, #tpu.memory_space<vmem>>, vector<16x96xf32>
      tpu.vector_store %arg7[%c0_11, %c0_12], %14 {strides = array<i32>} : memref<16x96xf32, #tpu.memory_space<vmem>>, vector<16x96xf32>,
    } else {
    }
    %c0 = arith.constant 0 : index
    %c0_1 = arith.constant 0 : index
    %3 = vector.load %arg7[%c0, %c0_1] : memref<16x96xf32, #tpu.memory_space<vmem>>, vector<16x96xf32>
    %c0_2 = arith.constant 0 : index
    %c0_3 = arith.constant 0 : index
    %4 = vector.load %arg3[%c0_2, %c0_3] : memref<16x32xf32, #tpu.memory_space<vmem>>, vector<16x32xf32>
    %5 = arith.truncf %4 : vector<16x32xf32> to vector<16x32xbf16>
    %c0_4 = arith.constant 0 : index
    %c0_5 = arith.constant 0 : index
    %6 = vector.load %arg4[%c0_4, %c0_5] : memref<32x96xf32, #tpu.memory_space<vmem>>, vector<32x96xf32>
    %7 = arith.truncf %6 : vector<32x96xf32> to vector<32x96xbf16>
    %cst = arith.constant dense<0.000000e+00> : vector<16x96xf32>
    %8 = tpu.matmul %5, %7, %cst {dimension_numbers = #tpu.dot_dimension_numbers<[1], [0], [0], [1], [0, 0, 1, 1], [], []>} : vector<16x32xbf16>, vector<32x96xbf16>, vector<16x96xf32> -> vector<16x96xf32>
    %9 = arith.addf %3, %8 : vector<16x96xf32>
    %c0_6 = arith.constant 0 : index
    %c0_7 = arith.constant 0 : index
    %10 = vector.load %arg7[%c0_6, %c0_7] : memref<16x96xf32, #tpu.memory_space<vmem>>, vector<16x96xf32>
    tpu.vector_store %arg7[%c0_6, %c0_7], %9 {strides = array<i32>} : memref<16x96xf32, #tpu.memory_space<vmem>>, vector<16x96xf32>,
    %c0_i32_8 = arith.constant 0 : i32
    %11 = arith.cmpi eq, %arg2, %c0_i32_8 : i32
    %12 = arith.extui %11 : i1 to i32
    %c0_i32_9 = arith.constant 0 : i32
    %13 = arith.cmpi ne, %12, %c0_i32_9 : i32
    scf.if %13 {
      %c0_10 = arith.constant 0 : index
      %c0_11 = arith.constant 0 : index
      %14 = vector.load %arg7[%c0_10, %c0_11] : memref<16x96xf32, #tpu.memory_space<vmem>>, vector<16x96xf32>
      %c0_12 = arith.constant 0 : index
      %c0_13 = arith.constant 0 : index
      %15 = vector.load %arg5[%c0_12, %c0_13] : memref<1x96xf32, #tpu.memory_space<vmem>>, vector<1x96xf32>
      %16 = vector.broadcast %15 : vector<1x96xf32> to vector<16x96xf32>
      %17 = arith.addf %14, %16 : vector<16x96xf32>
      %c0_14 = arith.constant 0 : index
      %c0_15 = arith.constant 0 : index
      %18 = vector.load %arg6[%c0_14, %c0_15] : memref<16x96xf32, #tpu.memory_space<vmem>>, vector<16x96xf32>
      tpu.vector_store %arg6[%c0_14, %c0_15], %17 {strides = array<i32>} : memref<16x96xf32, #tpu.memory_space<vmem>>, vector<16x96xf32>,
    } else {
    }
    return
  }
  func.func @transform_0(%arg0: i32, %arg1: i32, %arg2: i32) -> (i32, i32) {
    %c0_i32 = arith.constant 0 : i32
    return %arg0, %arg2 : i32, i32
  }
  func.func @transform_1(%arg0: i32, %arg1: i32, %arg2: i32) -> (i32, i32) {
    %c0_i32 = arith.constant 0 : i32
    return %arg2, %arg1 : i32, i32
  }
  func.func @transform_2(%arg0: i32, %arg1: i32, %arg2: i32) -> (i32, i32) {
    %c0_i32 = arith.constant 0 : i32
    %c0_i32_0 = arith.constant 0 : i32
    return %c0_i32, %arg1 : i32, i32
  }
  func.func @transform_3(%arg0: i32, %arg1: i32, %arg2: i32) -> (i32, i32) {
    %c0_i32 = arith.constant 0 : i32
    return %arg0, %arg1 : i32, i32
  }
}

</mosaic_0001>

<llo_original>
// kernel: tpu_custom_call.1
$region0: #{tpu_custom_call.1}
  #allocation0 [shape = 'u32[]', space=smem, size = 0x4, offset = 0x4, fixed_abs, tag = 'smem constant byte address 0x4 - core index']
  #allocation1 [shape = 'u32[144,128]{1,0:T(1,128)}', space=vmem, size = 0x12000, scoped, tag = 'internal scratch']
  #allocation2 [shape = 'f32[16,96]{1,0:T(8,128)}', space=vmem, size = 0x2000, scoped, tag = 'scratch operand']
  %s0 = inlined_call_operand.hbm [shape: f32[16,32], index: 0, kind: input, shape index: {}]
  %s1 = inlined_call_operand.hbm [shape: f32[32,96], index: 1, kind: input, shape index: {}]
  %s2 = inlined_call_operand.vmem [shape: f32[1,96], index: 2, kind: input, shape index: {}]
  %s3 = inlined_call_operand.hbm [shape: f32[16,96], index: 3, kind: output, shape index: {}]
  %s4 = sld [smem:[#allocation0]]
  $region38: #{tpu_custom_call.1} parent=0
    _
  %s6 = ssub.s32 1, %s4
  %s7 = scalar_select 0, %s6, %s4
  $region1: #{tpu_custom_call.1} parent=0
    #allocation3 [shape = 'u8[8192]{0}', space=vmem, size = 0x2000, scoped, tag = 'input window, operand 0, single buffered']
    #allocation4 [shape = 's32[1]{0}', space=sflag, size = 0x4, scoped, tag = 'scoped memory for tpu_custom_call.1']
    #allocation5 [shape = 's32[1]{0}', space=sflag, size = 0x4, scoped, tag = 'scoped memory for tpu_custom_call.1']
    #allocation6 [shape = 'u8[16384]{0}', space=vmem, size = 0x4000, scoped, tag = 'input window, operand 1, single buffered']
    #allocation7 [shape = 's32[1]{0}', space=sflag, size = 0x4, scoped, tag = 'scoped memory for tpu_custom_call.1']
    #allocation8 [shape = 'u8[8192]{0}', space=vmem, size = 0x2000, scoped, tag = 'output window, operand 0, single buffered']
    %8 = vsyncpa [#allocation4], 0
    %9 = vsyncpa [#allocation7], 0
    %10 = vsyncpa [#allocation5], 0
    // Predicated region
    $region2: #{tpu_custom_call.1} parent=1 // pred_check
      _
    $region3: #{tpu_custom_call.1} parent=1 // pred_check_branch
      %12 = sbr.rel (0) target = $region5
    $region4: #{tpu_custom_call.1} parent=1 // pred_region
      %s14 = ssub.s32 256, 256
      %15 = vsyncadd [#allocation4], %s14
      %s16 = sshll.u32 [#allocation3], 4
      %s17 = int_to_ptr.vmem [resolvable:$true] %s16
      %22 = dma.hbm_to_vmem [thread:$0]  %s0, 256, %s17, [#allocation4], 128, 128, 8
    $region5: #{tpu_custom_call.1} parent=1 // pred_fallthru
      _
    // Predicated region
    $region6: #{tpu_custom_call.1} parent=1 // pred_check
      _
    $region7: #{tpu_custom_call.1} parent=1 // pred_check_branch
      %24 = sbr.rel (0) target = $region9
    $region8: #{tpu_custom_call.1} parent=1 // pred_region
      %s26 = ssub.s32 512, 512
      %27 = vsyncadd [#allocation7], %s26
      %s28 = sshll.u32 [#allocation6], 4
      %s29 = int_to_ptr.vmem [resolvable:$true] %s28
      %34 = dma.hbm_to_vmem [thread:$0]  %s1, 512, %s29, [#allocation7], 128, 128, 8
    $region9: #{tpu_custom_call.1} parent=1 // pred_fallthru
      _
    // Predicated region
    $region10: #{tpu_custom_call.1} parent=1 // pred_check
      _
    $region11: #{tpu_custom_call.1} parent=1 // pred_check_branch
      %36 = sbr.rel (0) target = $region13
    $region12: #{tpu_custom_call.1} parent=1 // pred_region
      _
    $region13: #{tpu_custom_call.1} parent=1 // pred_fallthru
      _
    // Predicated region
    $region14: #{tpu_custom_call.1} parent=1 // pred_check
      _
    $region15: #{tpu_custom_call.1} parent=1 // pred_check_branch
      %38 = sbr.rel (0) target = $region17
    $region16: #{tpu_custom_call.1} parent=1 // pred_region
      %39 = dma.done [#allocation4], 256
    $region17: #{tpu_custom_call.1} parent=1 // pred_fallthru
      _
    // Predicated region
    $region18: #{tpu_custom_call.1} parent=1 // pred_check
      _
    $region19: #{tpu_custom_call.1} parent=1 // pred_check_branch
      %41 = sbr.rel (0) target = $region21
    $region20: #{tpu_custom_call.1} parent=1 // pred_region
      %42 = dma.done [#allocation7], 512
    $region21: #{tpu_custom_call.1} parent=1 // pred_fallthru
      _
    %p44 = scmp.eq.s32.totalorder 0, 0
    // Predicated region
    $region22: #{tpu_custom_call.1} parent=1 // pred_check
      %p45 = pneg %p44
    $region23: #{tpu_custom_call.1} parent=1 // pred_check_branch
      %47 = sbr.rel (%p45) target = $region25
    $region24: #{tpu_custom_call.1} parent=1 // pred_region
      %vm48 = vcmask 785408
      %49 = vst.msk [vmem:[#allocation2] sm:$0xff] %vm48, 0.0
      %50 = vst.msk [vmem:[#allocation2 + $0x8] sm:$0xff] %vm48, 0.0
    $region25: #{tpu_custom_call.1} parent=1 // pred_fallthru
      _
    %v51 = vld [vmem:[#allocation2] sm:$0xff]
    %v52 = vld [vmem:[#allocation2 + $0x8] sm:$0xff]
    %v53 = vld [vmem:[#allocation3] sm:$0xff]
    %v54 = vld [vmem:[#allocation3 + $0x8] sm:$0xff]
    %v55 = vpack.c.bf16 %v54, %v53
    %v56 = vld [vmem:[#allocation6] sm:$0xff]
    %v57 = vld [vmem:[#allocation6 + $0x8] sm:$0xff]
    %v58 = vld [vmem:[#allocation6 + $0x10] sm:$0xff]
    %v59 = vld [vmem:[#allocation6 + $0x18] sm:$0xff]
    %v60 = vpack.c.bf16 %v57, %v56
    %v61 = vpack.c.bf16 %v59, %v58
    %vm62 = vcmask 261120
    %v64 = vsel %vm62, %v55, 0
    %66 = vmatprep.subr.bf16.mxu0 0
    %67 = vmatpush1.bf16.msra.mxu0 %v60
    %68 = vmatprep.subr.bf16.mxu0 0
    %69 = vmatpush1.bf16.msra.mxu0 %v61
    %70 = vmatprep.subr.bf16.mxu0 0
    %71 = vmatpush1.bf16.msra.mxu0 0
    %72 = vmatprep.subr.bf16.mxu0 0
    %73 = vmatpush1.bf16.msra.mxu0 0
    %74 = vmatprep.subr.bf16.mxu0 0
    %75 = vmatpush1.bf16.msra.mxu0 0
    %76 = vmatprep.subr.bf16.mxu0 0
    %77 = vmatpush1.bf16.msra.mxu0 0
    %78 = vmatprep.subr.bf16.mxu0 0
    %79 = vmatpush1.bf16.msra.mxu0 0
    %80 = vmatprep.subr.bf16.mxu0 0
    %81 = vmatpush1.bf16.msra.mxu0 0
    %82 = vmatprep.subr.bf16.mxu0 0
    %83 = vmatpush1.bf16.msra.mxu0 0
    %84 = vmatprep.subr.bf16.mxu0 0
    %85 = vmatpush1.bf16.msra.mxu0 0
    %86 = vmatprep.subr.bf16.mxu0 0
    %87 = vmatpush1.bf16.msra.mxu0 0
    %88 = vmatprep.subr.bf16.mxu0 0
    %89 = vmatpush1.bf16.msra.mxu0 0
    %90 = vmatprep.subr.bf16.mxu0 0
    %91 = vmatpush1.bf16.msra.mxu0 0
    %92 = vmatprep.subr.bf16.mxu0 0
    %93 = vmatpush1.bf16.msra.mxu0 0
    %94 = vmatprep.subr.bf16.mxu0 0
    %95 = vmatpush1.bf16.msra.mxu0 0
    %96 = vmatprep.subr.bf16.mxu0 0
    %97 = vmatpush1.bf16.msra.mxu0 0
    %98 = vmatprep.mubr.bf16.mxu0 0
    %99 = vmatmul.mubr.bf16.gmra.mrb[0].mxu0 %v64
    %v100 = vpop.f32.mrb[0].mxu0
    %v101 = vadd.f32 0.0, %v100
    %v102 = vpop.f32.mrb[0].mxu0
    %v103 = vpop.f32.mrb[0].mxu0
    %v104 = vadd.f32 0.0, %v103
    %v105 = vpop.f32.mrb[0].mxu0
    %106 = vdwg.mxu0
    %v107 = vadd.f32 %v51, %v101
    %v108 = vadd.f32 %v52, %v104
    %vm109 = vcmask 785408
    %110 = vst.msk [vmem:[#allocation2] sm:$0xff] %vm109, %v107
    %111 = vst.msk [vmem:[#allocation2 + $0x8] sm:$0xff] %vm109, %v108
    // Predicated region
    $region26: #{tpu_custom_call.1} parent=1 // pred_check
      %p112 = pneg %p44
    $region27: #{tpu_custom_call.1} parent=1 // pred_check_branch
      %114 = sbr.rel (%p112) target = $region29
    $region28: #{tpu_custom_call.1} parent=1 // pred_region
      %v115 = vld [vmem:[#allocation2] sm:$0xff]
      %v116 = vld [vmem:[#allocation2 + $0x8] sm:$0xff]
      %v117 = vld [vmem:[%s2] sm:$0x1]
      %v119 = vlaneseq
      %v120 = vshrl.u32 %v119, 7
      %v121 = vsub.s32 0, %v120
      %v122 = vrot.slane %v117, %v121
      %v124 = vadd.f32 %v115, %v122
      %v125 = vadd.f32 %v116, %v122
      %126 = vst.msk [vmem:[#allocation8] sm:$0xff] %vm109, %v124
      %127 = vst.msk [vmem:[#allocation8 + $0x8] sm:$0xff] %vm109, %v125
    $region29: #{tpu_custom_call.1} parent=1 // pred_fallthru
      _
    // Predicated region
    $region30: #{tpu_custom_call.1} parent=1 // pred_check
      _
    $region31: #{tpu_custom_call.1} parent=1 // pred_check_branch
      %129 = sbr.rel (0) target = $region33
    $region32: #{tpu_custom_call.1} parent=1 // pred_region
      %s131 = ssub.s32 256, 256
      %132 = vsyncadd [#allocation5], %s131
      %s133 = sshll.u32 [#allocation8], 4
      %s134 = int_to_ptr.vmem [resolvable:$true] %s133
      %139 = dma.vmem_to_hbm [thread:$0]  %s134, 256, %s3, [#allocation5], 128, 128, 8
    $region33: #{tpu_custom_call.1} parent=1 // pred_fallthru
      _
    // Predicated region
    $region34: #{tpu_custom_call.1} parent=1 // pred_check
      _
    $region35: #{tpu_custom_call.1} parent=1 // pred_check_branch
      %141 = sbr.rel (0) target = $region37
    $region36: #{tpu_custom_call.1} parent=1 // pred_region
      %142 = dma.done [#allocation5], 256
    $region37: #{tpu_custom_call.1} parent=1 // pred_fallthru
      _
    %143 = vsyncpa [#allocation4], 1
    %144 = vsyncpa [#allocation7], 1
    %145 = vsyncpa [#allocation5], 1

</llo_original>
